<compile_context>
chip_gen: v7x
topology: tpu7x:2x2x1
jax: 0.10.0
libtpu: 0.0.40
codegen_flags: <defaults>
</compile_context>

<pallas_src>
import jax
import jax.numpy as jnp
import numpy as np
from jax import lax
from jax.experimental import pallas as pl
from jax.experimental.pallas import tpu as pltpu


def _adapter_kernel(x_ref, w_ref, b_ref, res_ref, o_ref, acc_ref):
    """One (tm, tn) output tile, accumulating over the K (c_in) grid axis."""
    k = pl.program_id(2)

    @pl.when(k == 0)
    def _():
        acc_ref[...] = jnp.zeros_like(acc_ref)

    # x_ref: (tm, tk), w_ref: (tn, tk)  ->  (tm, tn) = x @ W^T   (MXU, f32 acc)
    acc_ref[...] += lax.dot_general(
        x_ref[...], w_ref[...],
        dimension_numbers=(((1,), (1,)), ((), ())),
        preferred_element_type=jnp.float32)

    @pl.when(k == pl.num_programs(2) - 1)
    def _():
        z = acc_ref[...] + b_ref[...].astype(jnp.float32)        # (tm, tn)
        silu = z * (1.0 / (1.0 + jnp.exp(-z)))                   # SiLU in f32 (EUP exp)
        o_ref[...] = (silu + res_ref[...].astype(jnp.float32)).astype(o_ref.dtype)


def _pick_tile(dim, target, align):
    """Largest `align`-multiple divisor of `dim` that is <= target.

    Falls back to the full dim (always a legal block shape) when no aligned
    divisor exists or when the dim is already small.
    """
    if dim <= target:
        return dim
    start = (target // align) * align
    for cand in range(start, 0, -align):
        if dim % cand == 0:
            return cand
    return dim


def adapter_forward(x, w, b, *, tm_target=256, tn_target=256, tk_target=512):
    """x: [..., c_in], w: [c_in, c_in] (PyTorch Linear weight layout), b: [c_in]."""
    orig_shape = x.shape
    c_in = orig_shape[-1]
    assert w.shape == (c_in, c_in) and b.shape == (c_in,)

    x2 = x.reshape(-1, c_in)                  # (M, C)
    M = x2.shape[0]
    b2 = b.reshape(1, c_in)                   # (1, C)

    tm = _pick_tile(M, tm_target, 8)          # sublane-aligned
    tn = _pick_tile(c_in, tn_target, 128)     # lane-aligned output tiles
    tk = _pick_tile(c_in, tk_target, 128)     # lane-aligned contraction tiles
    grid = (M // tm, c_in // tn, c_in // tk)

    bytes_x = x2.size * x2.dtype.itemsize
    cost = pl.CostEstimate(
        flops=2 * M * c_in * c_in + 5 * M * c_in,
        transcendentals=M * c_in,
        bytes_accessed=2 * bytes_x + w.size * w.dtype.itemsize
        + b.size * b.dtype.itemsize + bytes_x,
    )

    out = pl.pallas_call(
        _adapter_kernel,
        out_shape=jax.ShapeDtypeStruct((M, c_in), x.dtype),
        grid_spec=pltpu.PrefetchScalarGridSpec(
            num_scalar_prefetch=0,
            grid=grid,
            in_specs=[
                pl.BlockSpec((tm, tk), lambda i, j, k: (i, k)),   # x (matmul LHS)
                pl.BlockSpec((tn, tk), lambda i, j, k: (j, k)),   # W (PyTorch layout)
                pl.BlockSpec((1, tn), lambda i, j, k: (0, j)),    # bias row
                pl.BlockSpec((tm, tn), lambda i, j, k: (i, j)),   # x (residual)
            ],
            out_specs=pl.BlockSpec((tm, tn), lambda i, j, k: (i, j)),
            scratch_shapes=[pltpu.VMEM((tm, tn), jnp.float32)],
        ),
        compiler_params=pltpu.CompilerParams(
            dimension_semantics=("parallel", "parallel", "arbitrary")),
        cost_estimate=cost,
    )(x2, w, b2, x2)

    return out.reshape(orig_shape)


def _reference(x, w, b):
    """Pure-JAX mirror of AdapterModule.forward."""
    xf = x.astype(jnp.float32)
    z = xf @ w.astype(jnp.float32).T + b.astype(jnp.float32)
    return (z * jax.nn.sigmoid(z) + xf).astype(x.dtype)


if __name__ == "__main__":
    key = jax.random.PRNGKey(0)
    k1, k2, k3 = jax.random.split(key, 3)

    batch, seq, hidden = 2, 8, 32                 # x: [2, 8, 32], c_in = 32
    x = jax.random.normal(k1, (batch, seq, hidden), dtype=jnp.float32)
    w = jax.random.normal(k2, (hidden, hidden), dtype=jnp.float32) * 0.05
    b = jax.random.normal(k3, (hidden,), dtype=jnp.float32) * 0.05

    # General (non-zero weight) path.
    out = jax.block_until_ready(adapter_forward(x, w, b))
    np.testing.assert_allclose(np.asarray(out), np.asarray(_reference(x, w, b)),
                               rtol=1e-5, atol=1e-5)

    # use_zi=True init: zero weight & bias  ->  adapter(x) = silu(0) = 0  ->  y == x.
    w0 = jnp.zeros_like(w)
    b0 = jnp.zeros_like(b)
    out0 = jax.block_until_ready(adapter_forward(x, w0, b0))
    np.testing.assert_allclose(np.asarray(out0), np.asarray(x), rtol=1e-6, atol=1e-6)

    print("KERNEL_OK")
</pallas_src>

<mosaic_0001>
module attributes {stable_mosaic.version = 11 : i64} {
  func.func @_adapter_kernel(%arg0: i32, %arg1: i32, %arg2: i32, %arg3: memref<16x32xf32, #tpu.memory_space<vmem>>, %arg4: memref<32x32xf32, #tpu.memory_space<vmem>>, %arg5: memref<1x32xf32, #tpu.memory_space<vmem>>, %arg6: memref<16x32xf32, #tpu.memory_space<vmem>>, %arg7: memref<16x32xf32, #tpu.memory_space<vmem>>, %arg8: memref<16x32xf32, #tpu.memory_space<vmem>>) attributes {dimension_semantics = [#tpu.dimension_semantics<parallel>, #tpu.dimension_semantics<parallel>, #tpu.dimension_semantics<arbitrary>], iteration_bounds = array<i64: 1, 1, 1>, scalar_prefetch = 0 : i64, scratch_operands = 1 : i64, tpu.core_type = #tpu.core_type<tc>, window_params = [{transform_indices = @transform_0, window_bounds = array<i64: 16, 32>}, {transform_indices = @transform_1, window_bounds = array<i64: 32, 32>}, {transform_indices = @transform_2, window_bounds = array<i64: 1, 32>}, {transform_indices = @transform_3, window_bounds = array<i64: 16, 32>}, {transform_indices = @transform_4, window_bounds = array<i64: 16, 32>}]} {
    %c0_i32 = arith.constant 0 : i32
    %0 = arith.cmpi eq, %arg2, %c0_i32 : i32
    %1 = arith.extui %0 : i1 to i32
    %c0_i32_0 = arith.constant 0 : i32
    %2 = arith.cmpi ne, %1, %c0_i32_0 : i32
    scf.if %2 {
      %cst_10 = arith.constant 0.000000e+00 : f32
      %12 = vector.broadcast %cst_10 : f32 to vector<16x32xf32>
      %c0_11 = arith.constant 0 : index
      %c0_12 = arith.constant 0 : index
      %13 = vector.load %arg8[%c0_11, %c0_12] : memref<16x32xf32, #tpu.memory_space<vmem>>, vector<16x32xf32>
      tpu.vector_store %arg8[%c0_11, %c0_12], %12 {strides = array<i32>} : memref<16x32xf32, #tpu.memory_space<vmem>>, vector<16x32xf32>,
    } else {
    }
    %c0 = arith.constant 0 : index
    %c0_1 = arith.constant 0 : index
    %3 = vector.load %arg8[%c0, %c0_1] : memref<16x32xf32, #tpu.memory_space<vmem>>, vector<16x32xf32>
    %c0_2 = arith.constant 0 : index
    %c0_3 = arith.constant 0 : index
    %4 = vector.load %arg3[%c0_2, %c0_3] : memref<16x32xf32, #tpu.memory_space<vmem>>, vector<16x32xf32>
    %c0_4 = arith.constant 0 : index
    %c0_5 = arith.constant 0 : index
    %5 = vector.load %arg4[%c0_4, %c0_5] : memref<32x32xf32, #tpu.memory_space<vmem>>, vector<32x32xf32>
    %cst = arith.constant dense<0.000000e+00> : vector<16x32xf32>
    %6 = tpu.matmul %4, %5, %cst {dimension_numbers = #tpu.dot_dimension_numbers<[1], [1], [0], [0], [0, 0, 1, 0], [], []>} : vector<16x32xf32>, vector<32x32xf32>, vector<16x32xf32> -> vector<16x32xf32>
    %7 = arith.addf %3, %6 : vector<16x32xf32>
    %c0_6 = arith.constant 0 : index
    %c0_7 = arith.constant 0 : index
    %8 = vector.load %arg8[%c0_6, %c0_7] : memref<16x32xf32, #tpu.memory_space<vmem>>, vector<16x32xf32>
    tpu.vector_store %arg8[%c0_6, %c0_7], %7 {strides = array<i32>} : memref<16x32xf32, #tpu.memory_space<vmem>>, vector<16x32xf32>,
    %c0_i32_8 = arith.constant 0 : i32
    %9 = arith.cmpi eq, %arg2, %c0_i32_8 : i32
    %10 = arith.extui %9 : i1 to i32
    %c0_i32_9 = arith.constant 0 : i32
    %11 = arith.cmpi ne, %10, %c0_i32_9 : i32
    scf.if %11 {
      %c0_10 = arith.constant 0 : index
      %c0_11 = arith.constant 0 : index
      %12 = vector.load %arg8[%c0_10, %c0_11] : memref<16x32xf32, #tpu.memory_space<vmem>>, vector<16x32xf32>
      %c0_12 = arith.constant 0 : index
      %c0_13 = arith.constant 0 : index
      %13 = vector.load %arg5[%c0_12, %c0_13] : memref<1x32xf32, #tpu.memory_space<vmem>>, vector<1x32xf32>
      %14 = vector.broadcast %13 : vector<1x32xf32> to vector<16x32xf32>
      %15 = arith.addf %12, %14 : vector<16x32xf32>
      %cst_14 = arith.constant 0.000000e+00 : f32
      %16 = vector.broadcast %cst_14 : f32 to vector<16x32xf32>
      %17 = arith.subf %16, %15 : vector<16x32xf32>
      %18 = math.exp %17 : vector<16x32xf32>
      %cst_15 = arith.constant 1.000000e+00 : f32
      %19 = vector.broadcast %cst_15 : f32 to vector<16x32xf32>
      %20 = arith.addf %19, %18 : vector<16x32xf32>
      %cst_16 = arith.constant 1.000000e+00 : f32
      %21 = vector.broadcast %cst_16 : f32 to vector<16x32xf32>
      %22 = arith.divf %21, %20 : vector<16x32xf32>
      %23 = arith.mulf %15, %22 : vector<16x32xf32>
      %c0_17 = arith.constant 0 : index
      %c0_18 = arith.constant 0 : index
      %24 = vector.load %arg6[%c0_17, %c0_18] : memref<16x32xf32, #tpu.memory_space<vmem>>, vector<16x32xf32>
      %25 = arith.addf %23, %24 : vector<16x32xf32>
      %c0_19 = arith.constant 0 : index
      %c0_20 = arith.constant 0 : index
      %26 = vector.load %arg7[%c0_19, %c0_20] : memref<16x32xf32, #tpu.memory_space<vmem>>, vector<16x32xf32>
      tpu.vector_store %arg7[%c0_19, %c0_20], %25 {strides = array<i32>} : memref<16x32xf32, #tpu.memory_space<vmem>>, vector<16x32xf32>,
    } else {
    }
    return
  }
  func.func @transform_0(%arg0: i32, %arg1: i32, %arg2: i32) -> (i32, i32) {
    %c0_i32 = arith.constant 0 : i32
    return %arg0, %arg2 : i32, i32
  }
  func.func @transform_1(%arg0: i32, %arg1: i32, %arg2: i32) -> (i32, i32) {
    %c0_i32 = arith.constant 0 : i32
    return %arg1, %arg2 : i32, i32
  }
  func.func @transform_2(%arg0: i32, %arg1: i32, %arg2: i32) -> (i32, i32) {
    %c0_i32 = arith.constant 0 : i32
    %c0_i32_0 = arith.constant 0 : i32
    return %c0_i32, %arg1 : i32, i32
  }
  func.func @transform_3(%arg0: i32, %arg1: i32, %arg2: i32) -> (i32, i32) {
    %c0_i32 = arith.constant 0 : i32
    return %arg0, %arg1 : i32, i32
  }
  func.func @transform_4(%arg0: i32, %arg1: i32, %arg2: i32) -> (i32, i32) {
    %c0_i32 = arith.constant 0 : i32
    return %arg0, %arg1 : i32, i32
  }
}

</mosaic_0001>

<llo_original>
// kernel: tpu_custom_call.1
$region0: #{tpu_custom_call.1}
  #allocation0 [shape = 'u32[]', space=smem, size = 0x4, offset = 0x4, fixed_abs, tag = 'smem constant byte address 0x4 - core index']
  #allocation1 [shape = 'u32[144,128]{1,0:T(1,128)}', space=vmem, size = 0x12000, scoped, tag = 'internal scratch']
  #allocation2 [shape = 'f32[16,32]{1,0:T(8,128)}', space=vmem, size = 0x2000, scoped, tag = 'scratch operand']
  %s0 = inlined_call_operand.hbm [shape: f32[16,32], index: 0, kind: input, shape index: {}]
  %s1 = inlined_call_operand.hbm [shape: f32[32,32], index: 1, kind: input, shape index: {}]
  %s2 = inlined_call_operand.vmem [shape: f32[1,32], index: 2, kind: input, shape index: {}]
  %s3 = inlined_call_operand.hbm [shape: f32[16,32], index: 3, kind: input, shape index: {}]
  %s4 = inlined_call_operand.hbm [shape: f32[16,32], index: 4, kind: output, shape index: {}]
  %s5 = sld [smem:[#allocation0]]
  $region46: #{tpu_custom_call.1} parent=0
    _
  %s7 = ssub.s32 1, %s5
  %s8 = scalar_select 0, %s7, %s5
  $region1: #{tpu_custom_call.1} parent=0
    #allocation3 [shape = 'u8[8192]{0}', space=vmem, size = 0x2000, scoped, tag = 'input window, operand 0, single buffered']
    #allocation4 [shape = 's32[1]{0}', space=sflag, size = 0x4, scoped, tag = 'scoped memory for tpu_custom_call.1']
    #allocation5 [shape = 's32[1]{0}', space=sflag, size = 0x4, scoped, tag = 'scoped memory for tpu_custom_call.1']
    #allocation6 [shape = 'u8[16384]{0}', space=vmem, size = 0x4000, scoped, tag = 'input window, operand 1, single buffered']
    #allocation7 [shape = 's32[1]{0}', space=sflag, size = 0x4, scoped, tag = 'scoped memory for tpu_custom_call.1']
    #allocation8 [shape = 'u8[8192]{0}', space=vmem, size = 0x2000, scoped, tag = 'input window, operand 3, single buffered']
    #allocation9 [shape = 'u8[8192]{0}', space=vmem, size = 0x2000, scoped, tag = 'output window, operand 0, single buffered']
    %9 = vsyncpa [#allocation4], 0
    %10 = vsyncpa [#allocation7], 0
    %11 = vsyncpa [#allocation5], 0
    // Predicated region
    $region2: #{tpu_custom_call.1} parent=1 // pred_check
      _
    $region3: #{tpu_custom_call.1} parent=1 // pred_check_branch
      %13 = sbr.rel (0) target = $region5
    $region4: #{tpu_custom_call.1} parent=1 // pred_region
      %s15 = ssub.s32 256, 256
      %16 = vsyncadd [#allocation4], %s15
      %s17 = sshll.u32 [#allocation3], 4
      %s18 = int_to_ptr.vmem [resolvable:$true] %s17
      %23 = dma.hbm_to_vmem [thread:$0]  %s0, 256, %s18, [#allocation4], 128, 128, 8
    $region5: #{tpu_custom_call.1} parent=1 // pred_fallthru
      _
    // Predicated region
    $region6: #{tpu_custom_call.1} parent=1 // pred_check
      _
    $region7: #{tpu_custom_call.1} parent=1 // pred_check_branch
      %25 = sbr.rel (0) target = $region9
    $region8: #{tpu_custom_call.1} parent=1 // pred_region
      %s27 = ssub.s32 512, 512
      %28 = vsyncadd [#allocation7], %s27
      %s29 = sshll.u32 [#allocation6], 4
      %s30 = int_to_ptr.vmem [resolvable:$true] %s29
      %35 = dma.hbm_to_vmem [thread:$0]  %s1, 512, %s30, [#allocation7], 128, 128, 8
    $region9: #{tpu_custom_call.1} parent=1 // pred_fallthru
      _
    // Predicated region
    $region10: #{tpu_custom_call.1} parent=1 // pred_check
      _
    $region11: #{tpu_custom_call.1} parent=1 // pred_check_branch
      %37 = sbr.rel (0) target = $region13
    $region12: #{tpu_custom_call.1} parent=1 // pred_region
      _
    $region13: #{tpu_custom_call.1} parent=1 // pred_fallthru
      _
    // Predicated region
    $region14: #{tpu_custom_call.1} parent=1 // pred_check
      _
    $region15: #{tpu_custom_call.1} parent=1 // pred_check_branch
      %39 = sbr.rel (0) target = $region17
    $region16: #{tpu_custom_call.1} parent=1 // pred_region
      %s41 = ssub.s32 256, 256
      %42 = vsyncadd [#allocation7], %s41
      %s43 = sshll.u32 [#allocation8], 4
      %s44 = int_to_ptr.vmem [resolvable:$true] %s43
      %49 = dma.hbm_to_vmem [thread:$0]  %s3, 256, %s44, [#allocation7], 128, 128, 8
    $region17: #{tpu_custom_call.1} parent=1 // pred_fallthru
      _
    // Predicated region
    $region18: #{tpu_custom_call.1} parent=1 // pred_check
      _
    $region19: #{tpu_custom_call.1} parent=1 // pred_check_branch
      %51 = sbr.rel (0) target = $region21
    $region20: #{tpu_custom_call.1} parent=1 // pred_region
      %52 = dma.done [#allocation4], 256
    $region21: #{tpu_custom_call.1} parent=1 // pred_fallthru
      _
    // Predicated region
    $region22: #{tpu_custom_call.1} parent=1 // pred_check
      _
    $region23: #{tpu_custom_call.1} parent=1 // pred_check_branch
      %54 = sbr.rel (0) target = $region25
    $region24: #{tpu_custom_call.1} parent=1 // pred_region
      %55 = dma.done [#allocation7], 512
    $region25: #{tpu_custom_call.1} parent=1 // pred_fallthru
      _
    // Predicated region
    $region26: #{tpu_custom_call.1} parent=1 // pred_check
      _
    $region27: #{tpu_custom_call.1} parent=1 // pred_check_branch
      %57 = sbr.rel (0) target = $region29
    $region28: #{tpu_custom_call.1} parent=1 // pred_region
      %58 = dma.done [#allocation7], 256
    $region29: #{tpu_custom_call.1} parent=1 // pred_fallthru
      _
    %p59 = scmp.eq.s32.totalorder 0, 0
    // Predicated region
    $region30: #{tpu_custom_call.1} parent=1 // pred_check
      %p60 = pneg %p59
    $region31: #{tpu_custom_call.1} parent=1 // pred_check_branch
      %62 = sbr.rel (%p60) target = $region33
    $region32: #{tpu_custom_call.1} parent=1 // pred_region
      %vm63 = vcmask 261120
      %64 = vst.msk [vmem:[#allocation2] sm:$0xff] %vm63, 0.0
      %65 = vst.msk [vmem:[#allocation2 + $0x8] sm:$0xff] %vm63, 0.0
    $region33: #{tpu_custom_call.1} parent=1 // pred_fallthru
      _
    %v66 = vld [vmem:[#allocation2] sm:$0xff]
    %v67 = vld [vmem:[#allocation2 + $0x8] sm:$0xff]
    %v68 = vld [vmem:[#allocation3] sm:$0xff]
    %v69 = vld [vmem:[#allocation3 + $0x8] sm:$0xff]
    %v70 = vld [vmem:[#allocation6] sm:$0xff]
    %v71 = vld [vmem:[#allocation6 + $0x8] sm:$0xff]
    %v72 = vld [vmem:[#allocation6 + $0x10] sm:$0xff]
    %v73 = vld [vmem:[#allocation6 + $0x18] sm:$0xff]
    %vm74 = vcmask 261120
    %v76 = vsel %vm74, %v68, 0
    %v79 = vsel %vm74, %v69, 0
    %v82 = vsel %vm74, %v70, 0
    %v85 = vsel %vm74, %v71, 0
    %v88 = vsel %vm74, %v72, 0
    %v91 = vsel %vm74, %v73, 0
    %93 = vmatprep.subr.mxu0 0.0
    %94 = vmatpush1.xpose.msra.mxu0 %v82
    %95 = vmatprep.subr.mxu0 0.0
    %96 = vmatpush1.xpose.msra.mxu0 %v85
    %97 = vmatprep.subr.mxu0 0.0
    %98 = vmatpush1.xpose.msra.mxu0 %v88
    %99 = vmatprep.subr.mxu0 0.0
    %100 = vmatpush1.xpose.msra.mxu0 %v91
    %101 = vmatprep.subr.mxu0 0.0
    %102 = vmatpush1.xpose.msra.mxu0 0.0
    %103 = vmatprep.subr.mxu0 0.0
    %104 = vmatpush1.xpose.msra.mxu0 0.0
    %105 = vmatprep.subr.mxu0 0.0
    %106 = vmatpush1.xpose.msra.mxu0 0.0
    %107 = vmatprep.subr.mxu0 0.0
    %108 = vmatpush1.xpose.msra.mxu0 0.0
    %109 = vmatprep.subr.mxu0 0.0
    %110 = vmatpush1.xpose.msra.mxu0 0.0
    %111 = vmatprep.subr.mxu0 0.0
    %112 = vmatpush1.xpose.msra.mxu0 0.0
    %113 = vmatprep.subr.mxu0 0.0
    %114 = vmatpush1.xpose.msra.mxu0 0.0
    %115 = vmatprep.subr.mxu0 0.0
    %116 = vmatpush1.xpose.msra.mxu0 0.0
    %117 = vmatprep.subr.mxu0 0.0
    %118 = vmatpush1.xpose.msra.mxu0 0.0
    %119 = vmatprep.subr.mxu0 0.0
    %120 = vmatpush1.xpose.msra.mxu0 0.0
    %121 = vmatprep.subr.mxu0 0.0
    %122 = vmatpush1.xpose.msra.mxu0 0.0
    %123 = vmatprep.subr.mxu0 0.0
    %124 = vmatpush1.xpose.msra.mxu0 0.0
    %125 = vmatprep.subr.mxu0 0.0
    %126 = vmatpush1.xpose.msra.mxu0 0.0
    %127 = vmatprep.subr.mxu0 0.0
    %128 = vmatpush1.xpose.msra.mxu0 0.0
    %129 = vmatprep.subr.mxu0 0.0
    %130 = vmatpush1.xpose.msra.mxu0 0.0
    %131 = vmatprep.subr.mxu0 0.0
    %132 = vmatpush1.xpose.msra.mxu0 0.0
    %133 = vmatprep.subr.mxu0 0.0
    %134 = vmatpush1.xpose.msra.mxu0 0.0
    %135 = vmatprep.subr.mxu0 0.0
    %136 = vmatpush1.xpose.msra.mxu0 0.0
    %137 = vmatprep.subr.mxu0 0.0
    %138 = vmatpush1.xpose.msra.mxu0 0.0
    %139 = vmatprep.subr.mxu0 0.0
    %140 = vmatpush1.xpose.msra.mxu0 0.0
    %141 = vmatprep.subr.mxu0 0.0
    %142 = vmatpush1.xpose.msra.mxu0 0.0
    %143 = vmatprep.subr.mxu0 0.0
    %144 = vmatpush1.xpose.msra.mxu0 0.0
    %145 = vmatprep.subr.mxu0 0.0
    %146 = vmatpush1.xpose.msra.mxu0 0.0
    %147 = vmatprep.subr.mxu0 0.0
    %148 = vmatpush1.xpose.msra.mxu0 0.0
    %149 = vmatprep.subr.mxu0 0.0
    %150 = vmatpush1.xpose.msra.mxu0 0.0
    %151 = vmatprep.subr.mxu0 0.0
    %152 = vmatpush1.xpose.msra.mxu0 0.0
    %153 = vmatprep.subr.mxu0 0.0
    %154 = vmatpush1.xpose.msra.mxu0 0.0
    %155 = vmatprep.subr.mxu0 0.0
    %156 = vmatpush1.xpose.msra.mxu0 0.0
    %157 = vmatprep.mubr.f32.mxu0 0.0
    %158 = vmatmul.mubr.f32.gmra.mrb[0].mxu0 %v76
    %v159 = vpop.f32.mrb[0].mxu0
    %v160 = vadd.f32 0.0, %v159
    %v161 = vpop.f32.mrb[0].mxu0
    %162 = vmatprep.mubr.f32.mxu0 0.0
    %163 = vmatmul.mubr.f32.gmra.mrb[0].mxu0 %v79
    %v164 = vpop.f32.mrb[0].mxu0
    %v165 = vadd.f32 0.0, %v164
    %v166 = vpop.f32.mrb[0].mxu0
    %167 = vdwg.mxu0
    %v168 = vadd.f32 %v66, %v160
    %v169 = vadd.f32 %v67, %v165
    %170 = vst.msk [vmem:[#allocation2] sm:$0xff] %vm74, %v168
    %171 = vst.msk [vmem:[#allocation2 + $0x8] sm:$0xff] %vm74, %v169
    // Predicated region
    $region34: #{tpu_custom_call.1} parent=1 // pred_check
      %p172 = pneg %p59
    $region35: #{tpu_custom_call.1} parent=1 // pred_check_branch
      %174 = sbr.rel (%p172) target = $region37
    $region36: #{tpu_custom_call.1} parent=1 // pred_region
      %v175 = vld [vmem:[#allocation2] sm:$0xff]
      %v176 = vld [vmem:[#allocation2 + $0x8] sm:$0xff]
      %v177 = vld [vmem:[%s2] sm:$0x1]
      %v179 = vlaneseq
      %v180 = vshrl.u32 %v179, 7
      %v181 = vsub.s32 0, %v180
      %v182 = vrot.slane %v177, %v181
      %v184 = vadd.f32 %v175, %v182
      %v185 = vadd.f32 %v176, %v182
      %v186 = vsub.f32 0.0, %v184
      %v187 = vsub.f32 0.0, %v185
      %v188 = vmul.f32 %v186, 1.442695
      %v189 = vpow.pop %v188
      %v190 = vmul.f32 %v187, 1.442695
      %v191 = vpow.pop %v190
      %v192 = vadd.f32 %v189, 1.0
      %v193 = vadd.f32 %v191, 1.0
      %v194 = vrcp.pop %v192
      %v195 = vmul.f32 1.0, %v194
      %v196 = vrcp.pop %v193
      %v197 = vmul.f32 1.0, %v196
      %v198 = vmul.f32 %v184, %v195
      %v199 = vmul.f32 %v185, %v197
      %v200 = vld [vmem:[#allocation8] sm:$0xff]
      %v201 = vld [vmem:[#allocation8 + $0x8] sm:$0xff]
      %v202 = vadd.f32 %v198, %v200
      %v203 = vadd.f32 %v199, %v201
      %204 = vst.msk [vmem:[#allocation9] sm:$0xff] %vm74, %v202
      %205 = vst.msk [vmem:[#allocation9 + $0x8] sm:$0xff] %vm74, %v203
    $region37: #{tpu_custom_call.1} parent=1 // pred_fallthru
      _
    // Predicated region
    $region38: #{tpu_custom_call.1} parent=1 // pred_check
      _
    $region39: #{tpu_custom_call.1} parent=1 // pred_check_branch
      %207 = sbr.rel (0) target = $region41
    $region40: #{tpu_custom_call.1} parent=1 // pred_region
      %s209 = ssub.s32 256, 256
      %210 = vsyncadd [#allocation5], %s209
      %s211 = sshll.u32 [#allocation9], 4
      %s212 = int_to_ptr.vmem [resolvable:$true] %s211
      %217 = dma.vmem_to_hbm [thread:$0]  %s212, 256, %s4, [#allocation5], 128, 128, 8
    $region41: #{tpu_custom_call.1} parent=1 // pred_fallthru
      _
    // Predicated region
    $region42: #{tpu_custom_call.1} parent=1 // pred_check
      _
    $region43: #{tpu_custom_call.1} parent=1 // pred_check_branch
      %219 = sbr.rel (0) target = $region45
    $region44: #{tpu_custom_call.1} parent=1 // pred_region
      %220 = dma.done [#allocation5], 256
    $region45: #{tpu_custom_call.1} parent=1 // pred_fallthru
      _
    %221 = vsyncpa [#allocation4], 1
    %222 = vsyncpa [#allocation7], 1
    %223 = vsyncpa [#allocation5], 1

</llo_original>
